<compile_context>
chip_gen: v7x
topology: tpu7x:2x2x1
jax: 0.10.0
libtpu: 0.0.40
codegen_flags: <defaults>
</compile_context>

<pallas_src>
import functools
import math

import jax
import jax.numpy as jnp
from jax import lax
from jax.experimental import pallas as pl
from jax.experimental.pallas import tpu as pltpu


def _gat_kernel(wh1_ref, wh2_ref, wh_ref, adj_ref, out_ref, *,
                alpha, denom_col, concat):
    """One grid step = one row-tile of query nodes.

    wh1_ref : (row_tile, 1)        f32  query-side scores (Wh @ a1), tiled
    wh2_ref : (8, N_pad)           f32  key-side scores (Wh @ a2) in row 0, resident
    wh_ref  : (N_pad, Fout_pad)    bf16 Wh values + ones column at denom_col, resident
    adj_ref : (row_tile, N_pad)    int8 adjacency row tile, streamed
    out_ref : (row_tile, Fout_pad) f32
    """
    f32 = jnp.float32

    # e = LeakyReLU(Wh1 + Wh2^T, negative_slope=alpha): the O(N^2) element-wise part.
    wh2_row = wh2_ref[...][0:1, :]                           # (1, N_pad)
    e = wh1_ref[...] + wh2_row                               # (row_tile, N_pad)
    e = jnp.where(e > 0, e, e * alpha)

    # Mask directly on the int8 tile (no per-element int8->f32 upcast).  Padded
    # key columns have adj == 0, so their exp() underflows to exactly 0 below.
    att = jnp.where(adj_ref[...] != 0, e, f32(-9e15))

    # Softmax numerator.  Max-subtraction kept for overflow safety / PyTorch
    # parity.  Cast to the value dtype so the MXU gets bf16 operands.
    att_max = jnp.max(att, axis=1, keepdims=True)
    p = jnp.exp(att - att_max).astype(wh_ref.dtype)          # (row_tile, N_pad)

    # attention @ Wh with the softmax denominator folded in: the ones column at
    # denom_col accumulates sum_k exp(.) on the MXU for free (f32 accumulation).
    acc = jnp.dot(p, wh_ref[...], preferred_element_type=f32)  # (row_tile, Fout_pad)
    denom = acc[:, denom_col:denom_col + 1]                    # (row_tile, 1)
    h_prime = acc * pl.reciprocal(denom, approx=False)         # EUP reciprocal

    # TODO(synk): F.dropout on the attention matrix is omitted (eval-mode /
    # training=False behaviour, which is the identity).

    if concat:
        # ELU with an expm1-accurate negative branch: series x + x^2/2 for
        # x > -1e-3 avoids the exp(x)-1 cancellation near 0.
        series = h_prime * (1.0 + 0.5 * h_prime)
        exp_m1 = jnp.where(h_prime > -1e-3, series, jnp.exp(h_prime) - 1.0)
        out_ref[...] = jnp.where(h_prime > 0, h_prime, exp_m1)
    else:
        out_ref[...] = h_prime


def _round_up(x, m):
    return ((x + m - 1) // m) * m


def _tpu_generation_defaults():
    """(row_tile cap, vmem_limit_bytes) per TPU generation."""
    try:
        kind = jax.devices()[0].device_kind.lower()
    except Exception:
        kind = ""
    if "v7" in kind or "7x" in kind:
        # v7x: 64 MiB physical VMEM per TC -> smaller tiles, tighter scoped limit.
        return 256, 56 * 1024 * 1024
    # v5e / v6e: 128 MiB VMEM -> bigger row tiles amortize per-step overhead.
    return 512, 96 * 1024 * 1024


def gat_forward(h, adj, W, a, alpha, *, concat=True, row_tile=None,
                value_dtype=jnp.bfloat16):
    """Pallas GAT layer forward (concat=True => ELU output; eval-mode dropout)."""
    n, in_f = h.shape
    out_f = W.shape[1]

    cap, vmem_limit = _tpu_generation_defaults()
    if row_tile is None:
        row_tile = min(cap, _round_up(n, 128))
    assert row_tile % 128 == 0, "row_tile must be a multiple of 128"
    n_pad = _round_up(n, row_tile)
    # out_f + 1 guarantees at least one spare padded lane for the folded
    # softmax-denominator ones column.
    out_pad = _round_up(out_f + 1, 128)
    denom_col = out_f

    f32 = jnp.float32
    P = lax.Precision.HIGHEST

    # ---- hoisted projections (tiny MXU work, done once by XLA) -------------
    wh = jnp.dot(h.astype(f32), W.astype(f32), precision=P)        # (n, out_f)
    a_f = a.astype(f32)
    wh1 = jnp.dot(wh, a_f[:out_f, :], precision=P)                 # (n, 1) query scores
    wh2 = jnp.dot(wh, a_f[out_f:, :], precision=P)                 # (n, 1) key scores

    # ---- padded, lane-dense operands ----------------------------------------
    wh1_p = jnp.zeros((n_pad, 1), f32).at[:n, :].set(wh1)
    wh2_p = jnp.zeros((8, n_pad), f32).at[0, :n].set(wh2[:, 0])
    wh_p = jnp.zeros((n_pad, out_pad), f32).at[:n, :out_f].set(wh)
    wh_p = wh_p.at[:, denom_col].set(1.0)       # ones column -> row-sum of exp()
    wh_v = wh_p.astype(value_dtype)             # bf16 MXU operand (f32 accumulate)
    # int8 adjacency: 4x less HBM/DMA traffic than f32 for the O(N^2) operand.
    adj_p = jnp.zeros((n_pad, n_pad), jnp.int8).at[:n, :n].set(
        (adj > 0).astype(jnp.int8))

    grid = (n_pad // row_tile,)
    kernel = functools.partial(_gat_kernel, alpha=float(alpha),
                               denom_col=denom_col, concat=concat)

    out_padded = pl.pallas_call(
        kernel,
        out_shape=jax.ShapeDtypeStruct((n_pad, out_pad), f32),
        grid=grid,
        in_specs=[
            pl.BlockSpec((row_tile, 1), lambda i: (i, 0)),      # wh1 (tiled)
            pl.BlockSpec((8, n_pad), lambda i: (0, 0)),         # wh2 row (resident)
            pl.BlockSpec((n_pad, out_pad), lambda i: (0, 0)),   # Wh values (resident)
            pl.BlockSpec((row_tile, n_pad), lambda i: (i, 0)),  # adj int8 (streamed)
        ],
        out_specs=pl.BlockSpec((row_tile, out_pad), lambda i: (i, 0)),
        compiler_params=pltpu.CompilerParams(
            dimension_semantics=("parallel",),  # megacore sharding where available
            vmem_limit_bytes=vmem_limit,
        ),
    )(wh1_p, wh2_p, wh_v, adj_p)

    return out_padded[:n, :out_f]


def _xavier_uniform(key, shape, gain):
    fan_in, fan_out = shape[0], shape[1]
    bound = gain * math.sqrt(6.0 / (fan_in + fan_out))
    return jax.random.uniform(key, shape, jnp.float32, -bound, bound)


def _reference(h, adj, W, a, alpha):
    """Pure-JAX reference mirroring the PyTorch forward (eval mode)."""
    P = jax.lax.Precision.HIGHEST
    wh = jnp.dot(h, W, precision=P)
    out_f = W.shape[1]
    wh1 = jnp.dot(wh, a[:out_f, :], precision=P)
    wh2 = jnp.dot(wh, a[out_f:, :], precision=P)
    e = wh1 + wh2.T
    e = jnp.where(e > 0, e, alpha * e)
    att = jnp.where(adj > 0, e, -9000000000000000.0)
    att = jax.nn.softmax(att, axis=1)
    h_prime = jnp.dot(att, wh, precision=P)
    return jax.nn.elu(h_prime)


if __name__ == "__main__":
    key = jax.random.PRNGKey(0)
    k_w, k_a, k_h, k_adj = jax.random.split(key, 4)

    N = 200         # number of graph nodes (padded to 256 internally)
    IN_F = 16       # in_features
    OUT_F = 32      # out_features
    ALPHA = 0.2     # LeakyReLU negative slope
    DROPOUT = 0.6   # unused at inference (identity)

    # Deterministic parameter init (matches nn.init.xavier_uniform_ w/ gain=1.414)
    W = _xavier_uniform(k_w, (IN_F, OUT_F), gain=1.414)
    a = _xavier_uniform(k_a, (2 * OUT_F, 1), gain=1.414)

    # Inputs: node features and a random 0/1 adjacency (self loops included).
    h = jax.random.normal(k_h, (N, IN_F), dtype=jnp.float32)
    adj = (jax.random.uniform(k_adj, (N, N)) > 0.5).astype(jnp.float32)
    adj = jnp.maximum(adj, jnp.eye(N, dtype=jnp.float32))

    # row_tile=128 -> grid=(2,) so the tiled / streamed-adjacency path runs.
    out_bf16 = jax.block_until_ready(gat_forward(h, adj, W, a, ALPHA, row_tile=128))
    # Exact-structure check with f32 value matmul (numerically faithful path).
    out_f32 = jax.block_until_ready(
        gat_forward(h, adj, W, a, ALPHA, row_tile=128, value_dtype=jnp.float32))

    ref = _reference(h, adj, W, a, ALPHA)
    assert out_bf16.shape == (N, OUT_F)
    assert jnp.allclose(out_f32, ref, atol=1e-3, rtol=1e-3), "f32 path mismatch"
    # bf16 MXU operands: ~1e-3 relative error budget on the value matmul.
    assert jnp.allclose(out_bf16, ref, atol=2e-2, rtol=2e-2), "bf16 path mismatch"

    print("KERNEL_OK")
</pallas_src>

<mosaic_0001>
module attributes {stable_mosaic.version = 11 : i64} {
  func.func @_gat_kernel(%arg0: i32, %arg1: memref<128x1xf32, #tpu.memory_space<vmem>>, %arg2: memref<8x256xf32, #tpu.memory_space<vmem>>, %arg3: memref<256x128xbf16, #tpu.memory_space<vmem>>, %arg4: memref<128x256xi8, #tpu.memory_space<vmem>>, %arg5: memref<128x128xf32, #tpu.memory_space<vmem>>) attributes {dimension_semantics = [#tpu.dimension_semantics<parallel>], iteration_bounds = array<i64: 2>, scalar_prefetch = 0 : i64, scratch_operands = 0 : i64, tpu.core_type = #tpu.core_type<tc>, window_params = [{transform_indices = @transform_0, window_bounds = array<i64: 128, 1>}, {pipeline_mode = #tpu.pipeline_mode<synchronous>, transform_indices = @transform_1, window_bounds = array<i64: 8, 256>}, {pipeline_mode = #tpu.pipeline_mode<synchronous>, transform_indices = @transform_2, window_bounds = array<i64: 256, 128>}, {transform_indices = @transform_3, window_bounds = array<i64: 128, 256>}, {transform_indices = @transform_4, window_bounds = array<i64: 128, 128>}]} {
    %c0 = arith.constant 0 : index
    %c0_0 = arith.constant 0 : index
    %0 = vector.load %arg2[%c0, %c0_0] : memref<8x256xf32, #tpu.memory_space<vmem>>, vector<8x256xf32>
    %1 = vector.extract_strided_slice %0 {offsets = [0, 0], sizes = [1, 256], strides = [1, 1]} : vector<8x256xf32> to vector<1x256xf32>
    %c0_1 = arith.constant 0 : index
    %c0_2 = arith.constant 0 : index
    %2 = vector.load %arg1[%c0_1, %c0_2] : memref<128x1xf32, #tpu.memory_space<vmem>>, vector<128x1xf32>
    %3 = vector.broadcast %2 : vector<128x1xf32> to vector<128x256xf32>
    %4 = vector.broadcast %1 : vector<1x256xf32> to vector<128x256xf32>
    %5 = arith.addf %3, %4 : vector<128x256xf32>
    %cst = arith.constant 0.000000e+00 : f32
    %6 = vector.broadcast %cst : f32 to vector<128x256xf32>
    %7 = arith.cmpf ogt, %5, %6 : vector<128x256xf32>
    %cst_3 = arith.constant 2.000000e-01 : f32
    %8 = vector.broadcast %cst_3 : f32 to vector<128x256xf32>
    %9 = arith.mulf %5, %8 : vector<128x256xf32>
    %10 = arith.select %7, %5, %9 : vector<128x256xi1>, vector<128x256xf32>
    %c0_4 = arith.constant 0 : index
    %c0_5 = arith.constant 0 : index
    %11 = vector.load %arg4[%c0_4, %c0_5] : memref<128x256xi8, #tpu.memory_space<vmem>>, vector<128x256xi8>
    %c0_i8 = arith.constant 0 : i8
    %12 = vector.broadcast %c0_i8 : i8 to vector<128x256xi8>
    %13 = arith.cmpi ne, %11, %12 : vector<128x256xi8>
    %cst_6 = arith.constant -9.000000e+15 : f32
    %14 = vector.broadcast %cst_6 : f32 to vector<128x256xf32>
    %15 = arith.select %13, %10, %14 : vector<128x256xi1>, vector<128x256xf32>
    %cst_7 = arith.constant dense<0xFF800000> : vector<128xf32>
    %16 = vector.multi_reduction <maximumf>, %15, %cst_7 [1] : vector<128x256xf32> to vector<128xf32>
    %17 = vector.shape_cast %16 : vector<128xf32> to vector<128x1xf32>
    %18 = vector.broadcast %17 : vector<128x1xf32> to vector<128x256xf32>
    %19 = arith.subf %15, %18 : vector<128x256xf32>
    %20 = math.exp %19 : vector<128x256xf32>
    %21 = arith.truncf %20 : vector<128x256xf32> to vector<128x256xbf16>
    %c0_8 = arith.constant 0 : index
    %c0_9 = arith.constant 0 : index
    %22 = vector.load %arg3[%c0_8, %c0_9] : memref<256x128xbf16, #tpu.memory_space<vmem>>, vector<256x128xbf16>
    %cst_10 = arith.constant dense<0.000000e+00> : vector<128x128xf32>
    %23 = tpu.matmul %21, %22, %cst_10 {dimension_numbers = #tpu.dot_dimension_numbers<[1], [0], [0], [1], [0, 0, 1, 1], [], []>} : vector<128x256xbf16>, vector<256x128xbf16>, vector<128x128xf32> -> vector<128x128xf32>
    %24 = vector.extract_strided_slice %23 {offsets = [0, 32], sizes = [128, 1], strides = [1, 1]} : vector<128x128xf32> to vector<128x1xf32>
    %25 = tpu.reciprocal %24 : vector<128x1xf32> -> vector<128x1xf32>
    %26 = vector.broadcast %25 : vector<128x1xf32> to vector<128x128xf32>
    %27 = arith.mulf %23, %26 : vector<128x128xf32>
    %cst_11 = arith.constant 5.000000e-01 : f32
    %28 = vector.broadcast %cst_11 : f32 to vector<128x128xf32>
    %29 = arith.mulf %28, %27 : vector<128x128xf32>
    %cst_12 = arith.constant 1.000000e+00 : f32
    %30 = vector.broadcast %cst_12 : f32 to vector<128x128xf32>
    %31 = arith.addf %30, %29 : vector<128x128xf32>
    %32 = arith.mulf %27, %31 : vector<128x128xf32>
    %cst_13 = arith.constant -1.000000e-03 : f32
    %33 = vector.broadcast %cst_13 : f32 to vector<128x128xf32>
    %34 = arith.cmpf ogt, %27, %33 : vector<128x128xf32>
    %35 = math.exp %27 : vector<128x128xf32>
    %cst_14 = arith.constant 1.000000e+00 : f32
    %36 = vector.broadcast %cst_14 : f32 to vector<128x128xf32>
    %37 = arith.subf %35, %36 : vector<128x128xf32>
    %38 = arith.select %34, %32, %37 : vector<128x128xi1>, vector<128x128xf32>
    %cst_15 = arith.constant 0.000000e+00 : f32
    %39 = vector.broadcast %cst_15 : f32 to vector<128x128xf32>
    %40 = arith.cmpf ogt, %27, %39 : vector<128x128xf32>
    %41 = arith.select %40, %27, %38 : vector<128x128xi1>, vector<128x128xf32>
    %c0_16 = arith.constant 0 : index
    %c0_17 = arith.constant 0 : index
    %42 = vector.load %arg5[%c0_16, %c0_17] : memref<128x128xf32, #tpu.memory_space<vmem>>, vector<128x128xf32>
    tpu.vector_store %arg5[%c0_16, %c0_17], %41 {strides = array<i32>} : memref<128x128xf32, #tpu.memory_space<vmem>>, vector<128x128xf32>,
    return
  }
  func.func @transform_0(%arg0: i32) -> (i32, i32) {
    %c0_i32 = arith.constant 0 : i32
    %c0_i32_0 = arith.constant 0 : i32
    return %arg0, %c0_i32 : i32, i32
  }
  func.func @transform_1(%arg0: i32) -> (i32, i32) {
    %c0_i32 = arith.constant 0 : i32
    %c0_i32_0 = arith.constant 0 : i32
    %c0_i32_1 = arith.constant 0 : i32
    return %c0_i32, %c0_i32_0 : i32, i32
  }
  func.func @transform_2(%arg0: i32) -> (i32, i32) {
    %c0_i32 = arith.constant 0 : i32
    %c0_i32_0 = arith.constant 0 : i32
    %c0_i32_1 = arith.constant 0 : i32
    return %c0_i32, %c0_i32_0 : i32, i32
  }
  func.func @transform_3(%arg0: i32) -> (i32, i32) {
    %c0_i32 = arith.constant 0 : i32
    %c0_i32_0 = arith.constant 0 : i32
    return %arg0, %c0_i32 : i32, i32
  }
  func.func @transform_4(%arg0: i32) -> (i32, i32) {
    %c0_i32 = arith.constant 0 : i32
    %c0_i32_0 = arith.constant 0 : i32
    return %arg0, %c0_i32 : i32, i32
  }
}

</mosaic_0001>

<llo_original>
// kernel: tpu_custom_call.1
$region0: #{tpu_custom_call.1}
  #allocation0 [shape = 'u32[]', space=smem, size = 0x4, offset = 0x4, fixed_abs, tag = 'smem constant byte address 0x4 - core index']
  #allocation1 [shape = 'u32[144,128]{1,0:T(1,128)}', space=vmem, size = 0x12000, scoped, tag = 'internal scratch']
  %s0 = inlined_call_operand.hbm [shape: f32[256,1], index: 0, kind: input, shape index: {}]
  %s1 = inlined_call_operand.hbm [shape: f32[8,256], index: 1, kind: input, shape index: {}]
  %s2 = inlined_call_operand.hbm [shape: bf16[256,128], index: 2, kind: input, shape index: {}]
  %s3 = inlined_call_operand.hbm [shape: s8[256,256], index: 3, kind: input, shape index: {}]
  %s4 = inlined_call_operand.hbm [shape: f32[256,128], index: 4, kind: output, shape index: {}]
  %s5 = sld [smem:[#allocation0]]
  $region65: #{tpu_custom_call.1} parent=0
    _
  %s7 = ssub.s32 1, %s5
  %s8 = scalar_select 0, %s7, %s5
  $region1: #{tpu_custom_call.1} parent=0
    #allocation2 [shape = 'u8[131072]{0}', space=vmem, size = 0x20000, scoped, tag = 'input window, operand 0']
    #allocation3 [shape = 's32[2]{0}', space=sflag, size = 0x8, scoped, tag = 'scoped memory for tpu_custom_call.1']
    #allocation4 [shape = 's32[2]{0}', space=sflag, size = 0x8, scoped, tag = 'scoped memory for tpu_custom_call.1']
    #allocation5 [shape = 'u8[8192]{0}', space=vmem, size = 0x2000, scoped, tag = 'input window, operand 1, single buffered']
    #allocation6 [shape = 's32[1]{0}', space=sflag, size = 0x4, scoped, tag = 'scoped memory for tpu_custom_call.1']
    #allocation7 [shape = 'u8[65536]{0}', space=vmem, size = 0x10000, scoped, tag = 'input window, operand 2, single buffered']
    #allocation8 [shape = 'u8[65536]{0}', space=vmem, size = 0x10000, scoped, tag = 'input window, operand 3']
    #allocation9 [shape = 's32[2]{0}', space=sflag, size = 0x8, scoped, tag = 'scoped memory for tpu_custom_call.1']
    #allocation10 [shape = 'u8[131072]{0}', space=vmem, size = 0x20000, scoped, tag = 'output window, operand 0']
    %9 = vsyncpa [#allocation3], 0
    %s10 = scalar_lea.sflag [#allocation3], 1
    %11 = vsyncpa %s10, 0
    %12 = vsyncpa [#allocation6], 0
    %13 = vsyncpa [#allocation9], 0
    %s14 = scalar_lea.sflag [#allocation9], 1
    %15 = vsyncpa %s14, 0
    %16 = vsyncpa [#allocation4], 0
    %s17 = scalar_lea.sflag [#allocation4], 1
    %18 = vsyncpa %s17, 0
    loop: start=0, step=1, limit=4
    $region2: #{tpu_custom_call.1} parent=1 // loop_pre_header
      _
    $region3: #{tpu_custom_call.1} parent=1 // loop_header
      %s20 = sphi 0, %s24
      %p21 = scmp.ge.s32.totalorder %s20, 4
      %s30 = sphi 0, %s32
      %s33 = sphi 0, %s30
      %s34 = sphi 0, %s33
      %s50 = sphi 0, %s34
      %s54 = sphi 0, %s54
      %s56 = sphi 0, %s54
      %s57 = sphi 0, %s56
      %s71 = sphi 0, %s57
      %s75 = sphi 0, %s75
      %s77 = sphi 0, %s75
      %s78 = sphi 0, %s77
      %s92 = sphi 0, %s78
      %s98 = sphi 0, %s100
      %s101 = sphi 0, %s98
      %s102 = sphi 0, %s101
      %s118 = sphi 0, %s102
      %s124 = sphi 0, %s126
      %s127 = sphi 0, %s124
      %s128 = sphi 0, %s127
      %s144 = sphi 0, %s128
    $region4: #{tpu_custom_call.1} parent=1 // loop_header_branch
      %23 = sbr.rel (%p21) target = $region8
    $region5: #{tpu_custom_call.1} parent=1 // loop_body
      %s25 = ssub.s32 %s20, 1
      %s26 = ssub.s32 %s20, 2
      %s27 = sadd.s32 %s20, 1
      %s28 = ssub.s32 %s20, %s27
      %p29 = scmp.eq.s32.totalorder %s28, 0
      %s31 = sadd.s32 %s30, 1
      %s32 = scalar_select %p29, %s30, %s31
      %p35 = pneg %p29
      %p36 = scmp.eq.s32.totalorder %s20, 1
      %p37 = por %p35, %p36
      %p38 = scmp.ne.s32.totalorder %s30, %s33
      %p39 = scmp.eq.s32.totalorder %s20, 0
      %p40 = por %p38, %p39
      %p41 = scmp.ne.s32.totalorder %s30, %s33
      %p42 = scmp.eq.s32.totalorder %s25, 1
      %p43 = por %p41, %p42
      %p44 = scmp.ne.s32.totalorder %s33, %s34
      %p45 = scmp.eq.s32.totalorder %s25, 0
      %p46 = por %p44, %p45
      %p47 = scmp.ne.s32.totalorder %s33, %s34
      %p48 = scmp.eq.s32.totalorder %s26, 1
      %p49 = por %p47, %p48
      %p51 = scmp.ne.s32.totalorder %s34, %s50
      %p52 = scmp.eq.s32.totalorder %s26, 0
      %p53 = por %p51, %p52
      %s55 = sadd.s32 %s54, 1
      %p58 = scmp.eq.s32.totalorder %s20, 1
      %p59 = scmp.ne.s32.totalorder %s54, %s56
      %p60 = scmp.eq.s32.totalorder %s20, 0
      %p61 = por %p59, %p60
      %p62 = scmp.ne.s32.totalorder %s54, %s56
      %p63 = scmp.eq.s32.totalorder %s25, 1
      %p64 = por %p62, %p63
      %p65 = scmp.ne.s32.totalorder %s56, %s57
      %p66 = scmp.eq.s32.totalorder %s25, 0
      %p67 = por %p65, %p66
      %p68 = scmp.ne.s32.totalorder %s56, %s57
      %p69 = scmp.eq.s32.totalorder %s26, 1
      %p70 = por %p68, %p69
      %p72 = scmp.ne.s32.totalorder %s57, %s71
      %p73 = scmp.eq.s32.totalorder %s26, 0
      %p74 = por %p72, %p73
      %s76 = sadd.s32 %s75, 1
      %p79 = scmp.eq.s32.totalorder %s20, 1
      %p80 = scmp.ne.s32.totalorder %s75, %s77
      %p81 = scmp.eq.s32.totalorder %s20, 0
      %p82 = por %p80, %p81
      %p83 = scmp.ne.s32.totalorder %s75, %s77
      %p84 = scmp.eq.s32.totalorder %s25, 1
      %p85 = por %p83, %p84
      %p86 = scmp.ne.s32.totalorder %s77, %s78
      %p87 = scmp.eq.s32.totalorder %s25, 0
      %p88 = por %p86, %p87
      %p89 = scmp.ne.s32.totalorder %s77, %s78
      %p90 = scmp.eq.s32.totalorder %s26, 1
      %p91 = por %p89, %p90
      %p93 = scmp.ne.s32.totalorder %s78, %s92
      %p94 = scmp.eq.s32.totalorder %s26, 0
      %p95 = por %p93, %p94
      %s96 = ssub.s32 %s20, %s27
      %p97 = scmp.eq.s32.totalorder %s96, 0
      %s99 = sadd.s32 %s98, 1
      %s100 = scalar_select %p97, %s98, %s99
      %p103 = pneg %p97
      %p104 = scmp.eq.s32.totalorder %s20, 1
      %p105 = por %p103, %p104
      %p106 = scmp.ne.s32.totalorder %s98, %s101
      %p107 = scmp.eq.s32.totalorder %s20, 0
      %p108 = por %p106, %p107
      %p109 = scmp.ne.s32.totalorder %s98, %s101
      %p110 = scmp.eq.s32.totalorder %s25, 1
      %p111 = por %p109, %p110
      %p112 = scmp.ne.s32.totalorder %s101, %s102
      %p113 = scmp.eq.s32.totalorder %s25, 0
      %p114 = por %p112, %p113
      %p115 = scmp.ne.s32.totalorder %s101, %s102
      %p116 = scmp.eq.s32.totalorder %s26, 1
      %p117 = por %p115, %p116
      %p119 = scmp.ne.s32.totalorder %s102, %s118
      %p120 = scmp.eq.s32.totalorder %s26, 0
      %p121 = por %p119, %p120
      %s122 = ssub.s32 %s20, %s27
      %p123 = scmp.eq.s32.totalorder %s122, 0
      %s125 = sadd.s32 %s124, 1
      %s126 = scalar_select %p123, %s124, %s125
      %p129 = pneg %p123
      %p130 = scmp.eq.s32.totalorder %s20, 1
      %p131 = por %p129, %p130
      %p132 = scmp.ne.s32.totalorder %s124, %s127
      %p133 = scmp.eq.s32.totalorder %s20, 0
      %p134 = por %p132, %p133
      %p135 = scmp.ne.s32.totalorder %s124, %s127
      %p136 = scmp.eq.s32.totalorder %s25, 1
      %p137 = por %p135, %p136
      %p138 = scmp.ne.s32.totalorder %s127, %s128
      %p139 = scmp.eq.s32.totalorder %s25, 0
      %p140 = por %p138, %p139
      %p141 = scmp.ne.s32.totalorder %s127, %s128
      %p142 = scmp.eq.s32.totalorder %s26, 1
      %p143 = por %p141, %p142
      %p145 = scmp.ne.s32.totalorder %s128, %s144
      %p146 = scmp.eq.s32.totalorder %s26, 0
      %p147 = por %p145, %p146
      %p148 = scmp.le.s32.totalorder 1, %s20
      %p149 = scmp.lt.s32.totalorder %s20, 3
      %p150 = pnand %p148, %p149
      %p151 = pneg %p150
      // Predicated region
      $region9: #{tpu_custom_call.1} parent=5 // pred_check
        _
      $region10: #{tpu_custom_call.1} parent=5 // pred_check_branch
        %153 = sbr.rel (%p150) target = $region12
      $region11: #{tpu_custom_call.1} parent=5 // pred_region
        %s154 = ssub.s32 %s20, 1
        // Predicated region
        $region13: #{tpu_custom_call.1} parent=11 // pred_check
          %p155 = pneg %p67
        $region14: #{tpu_custom_call.1} parent=11 // pred_check_branch
          %157 = sbr.rel (%p155) target = $region16
        $region15: #{tpu_custom_call.1} parent=11 // pred_region
          %s159 = ssub.s32 256, 256
          %160 = vsyncadd [#allocation6], %s159
          %s162 = sshll.u32 [#allocation5], 4
          %s163 = int_to_ptr.vmem [resolvable:$true] %s162
          %165 = dma.hbm_to_vmem [thread:$0]  %s1, 256, %s163, [#allocation6]
        $region16: #{tpu_custom_call.1} parent=11 // pred_fallthru
          _
        // Predicated region
        $region17: #{tpu_custom_call.1} parent=11 // pred_check
          %p166 = pneg %p88
        $region18: #{tpu_custom_call.1} parent=11 // pred_check_branch
          %168 = sbr.rel (%p166) target = $region20
        $region19: #{tpu_custom_call.1} parent=11 // pred_region
          %s170 = ssub.s32 2048, 2048
          %171 = vsyncadd [#allocation6], %s170
          %s172 = sshll.u32 [#allocation7], 4
          %s173 = int_to_ptr.vmem [resolvable:$true] %s172
          %178 = dma.hbm_to_vmem [thread:$0]  %s2, 2048, %s173, [#allocation6], 64, 64, 4
        $region20: #{tpu_custom_call.1} parent=11 // pred_fallthru
          _
      $region12: #{tpu_custom_call.1} parent=5 // pred_fallthru
        _
      %p179 = scmp.lt.s32.totalorder %s20, 2
      // Predicated region
      $region21: #{tpu_custom_call.1} parent=5 // pred_check
        %p180 = pneg %p179
      $region22: #{tpu_custom_call.1} parent=5 // pred_check_branch
        %182 = sbr.rel (%p180) target = $region24
      $region23: #{tpu_custom_call.1} parent=5 // pred_region
        // Predicated region
        $region25: #{tpu_custom_call.1} parent=23 // pred_check
          %p183 = pneg %p40
        $region26: #{tpu_custom_call.1} parent=23 // pred_check_branch
          %185 = sbr.rel (%p183) target = $region28
        $region27: #{tpu_custom_call.1} parent=23 // pred_region
          %s186 = sand.u32 %s30, 1
          %s187 = scalar_lea.sflag [#allocation3], %s186
          %s188 = sand.u32 %s30, 1
          %s189 = smul.addr %s188, 128
          %s190 = scalar_lea.vmem [#allocation2], %s189
          %s191 = smul.u32 16, %s20
          %s193 = ssub.s32 2048, 2048
          %194 = vsyncadd %s187, %s193
          %s195 = smul.addr %s191, 128
          %s196 = scalar_lea.hbm %s0, %s195
          %s197 = sshll.u32 %s190, 4
          %s198 = int_to_ptr.vmem [resolvable:$true] %s197
          %203 = dma.hbm_to_vmem [thread:$0]  %s196, 2048, %s198, %s187, 128, 128, 8
        $region28: #{tpu_custom_call.1} parent=23 // pred_fallthru
          _
        // Predicated region
        $region29: #{tpu_custom_call.1} parent=23 // pred_check
          %p204 = pneg %p108
        $region30: #{tpu_custom_call.1} parent=23 // pred_check_branch
          %206 = sbr.rel (%p204) target = $region32
        $region31: #{tpu_custom_call.1} parent=23 // pred_region
          %s207 = sand.u32 %s98, 1
          %s208 = scalar_lea.sflag [#allocation9], %s207
          %s209 = sand.u32 %s98, 1
          %s210 = smul.addr %s209, 64
          %s211 = scalar_lea.vmem [#allocation8], %s210
          %s212 = smul.u32 4, %s20
          %s214 = ssub.s32 1024, 1024
          %215 = vsyncadd %s208, %s214
          %s216 = smul.addr %s212, 2
          %s217 = smul.addr %s216, 128
          %s218 = scalar_lea.hbm %s3, %s217
          %s219 = sshll.u32 %s211, 4
          %s220 = int_to_ptr.vmem [resolvable:$true] %s219
          %225 = dma.hbm_to_vmem [thread:$0]  %s218, 1024, %s220, %s208, 256, 256, 16
        $region32: #{tpu_custom_call.1} parent=23 // pred_fallthru
          _
      $region24: #{tpu_custom_call.1} parent=5 // pred_fallthru
        _
      %p226 = scmp.le.s32.totalorder 1, %s20
      %p227 = scmp.lt.s32.totalorder %s20, 3
      %p228 = pnand %p226, %p227
      %p229 = pneg %p228
      // Predicated region
      $region33: #{tpu_custom_call.1} parent=5 // pred_check
        _
      $region34: #{tpu_custom_call.1} parent=5 // pred_check_branch
        %231 = sbr.rel (%p228) target = $region36
      $region35: #{tpu_custom_call.1} parent=5 // pred_region
        %s232 = ssub.s32 %s20, 1
        %s233 = sand.u32 %s33, 1
        %s234 = scalar_lea.sflag [#allocation3], %s233
        %s235 = sand.u32 %s33, 1
        %s236 = smul.addr %s235, 128
        %s237 = scalar_lea.vmem [#allocation2], %s236
        // Predicated region
        $region37: #{tpu_custom_call.1} parent=35 // pred_check
          %p238 = pneg %p46
        $region38: #{tpu_custom_call.1} parent=35 // pred_check_branch
          %240 = sbr.rel (%p238) target = $region40
        $region39: #{tpu_custom_call.1} parent=35 // pred_region
          %241 = dma.done %s234, 2048
        $region40: #{tpu_custom_call.1} parent=35 // pred_fallthru
          _
        // Predicated region
        $region41: #{tpu_custom_call.1} parent=35 // pred_check
          %p242 = pneg %p67
        $region42: #{tpu_custom_call.1} parent=35 // pred_check_branch
          %244 = sbr.rel (%p242) target = $region44
        $region43: #{tpu_custom_call.1} parent=35 // pred_region
          %245 = dma.done [#allocation6], 256
        $region44: #{tpu_custom_call.1} parent=35 // pred_fallthru
          _
        // Predicated region
        $region45: #{tpu_custom_call.1} parent=35 // pred_check
          %p246 = pneg %p88
        $region46: #{tpu_custom_call.1} parent=35 // pred_check_branch
          %248 = sbr.rel (%p246) target = $region48
        $region47: #{tpu_custom_call.1} parent=35 // pred_region
          %249 = dma.done [#allocation6], 2048
        $region48: #{tpu_custom_call.1} parent=35 // pred_fallthru
          _
        %s250 = sand.u32 %s101, 1
        %s251 = scalar_lea.sflag [#allocation9], %s250
        %s252 = sand.u32 %s101, 1
        %s253 = smul.addr %s252, 64
        %s254 = scalar_lea.vmem [#allocation8], %s253
        // Predicated region
        $region49: #{tpu_custom_call.1} parent=35 // pred_check
          %p255 = pneg %p114
        $region50: #{tpu_custom_call.1} parent=35 // pred_check_branch
          %257 = sbr.rel (%p255) target = $region52
        $region51: #{tpu_custom_call.1} parent=35 // pred_region
          %258 = dma.done %s251, 1024
        $region52: #{tpu_custom_call.1} parent=35 // pred_fallthru
          _
        %s259 = sand.u32 %s33, 1
        %s260 = scalar_lea.sflag [#allocation3], %s259
        %s261 = sand.u32 %s33, 1
        %s262 = smul.addr %s261, 128
        %s263 = scalar_lea.vmem [#allocation2], %s262
        %p264 = pneg %p46
        %p265 = pneg %p43
        %p266 = pneg %p67
        %p267 = pneg %p64
        %p268 = pneg %p88
        %p269 = pneg %p85
        %s270 = sand.u32 %s101, 1
        %s271 = scalar_lea.sflag [#allocation9], %s270
        %s272 = sand.u32 %s101, 1
        %s273 = smul.addr %s272, 64
        %s274 = scalar_lea.vmem [#allocation8], %s273
        %p275 = pneg %p114
        %p276 = pneg %p111
        %p277 = pneg %p140
        %p278 = pneg %p137
        %s279 = sand.u32 %s127, 1
        %s280 = scalar_lea.sflag [#allocation4], %s279
        %s281 = sand.u32 %s127, 1
        %s282 = smul.addr %s281, 128
        %s283 = scalar_lea.vmem [#allocation10], %s282
        %s284 = smul.u32 16, %s25
        %s285 = smul.u32 4, %s25
        %s286 = smul.u32 16, %s25
        %v290 = vld [vmem:[#allocation5] sm:$0xff]
        %v291 = vld [vmem:[#allocation5 + $0x8] sm:$0xff]
        %v292 = vld [vmem:[%s237] sm:$0xff]
        %v293 = vld [vmem:[%s237 + $0x8] sm:$0xff]
        %v294 = vld [vmem:[%s237 + $0x10] sm:$0xff]
        %v295 = vld [vmem:[%s237 + $0x18] sm:$0xff]
        %v296 = vld [vmem:[%s237 + $0x20] sm:$0xff]
        %v297 = vld [vmem:[%s237 + $0x28] sm:$0xff]
        %v298 = vld [vmem:[%s237 + $0x30] sm:$0xff]
        %v299 = vld [vmem:[%s237 + $0x38] sm:$0xff]
        %v300 = vld [vmem:[%s237 + $0x40] sm:$0xff]
        %v301 = vld [vmem:[%s237 + $0x48] sm:$0xff]
        %v302 = vld [vmem:[%s237 + $0x50] sm:$0xff]
        %v303 = vld [vmem:[%s237 + $0x58] sm:$0xff]
        %v304 = vld [vmem:[%s237 + $0x60] sm:$0xff]
        %v305 = vld [vmem:[%s237 + $0x68] sm:$0xff]
        %v306 = vld [vmem:[%s237 + $0x70] sm:$0xff]
        %v307 = vld [vmem:[%s237 + $0x78] sm:$0xff]
        %309 = vset.pattern.permute.xlu0 0
        %310 = vperm.xlu0 %309, %v292
        %v311 = vpop.permute.xlu0 %310
        %314 = vset.pattern.permute.xlu0 0
        %315 = vperm.xlu0 %314, %v293
        %v316 = vpop.permute.xlu0 %315
        %319 = vset.pattern.permute.xlu0 0
        %320 = vperm.xlu0 %319, %v294
        %v321 = vpop.permute.xlu0 %320
        %324 = vset.pattern.permute.xlu0 0
        %325 = vperm.xlu0 %324, %v295
        %v326 = vpop.permute.xlu0 %325
        %329 = vset.pattern.permute.xlu0 0
        %330 = vperm.xlu0 %329, %v296
        %v331 = vpop.permute.xlu0 %330
        %334 = vset.pattern.permute.xlu0 0
        %335 = vperm.xlu0 %334, %v297
        %v336 = vpop.permute.xlu0 %335
        %339 = vset.pattern.permute.xlu0 0
        %340 = vperm.xlu0 %339, %v298
        %v341 = vpop.permute.xlu0 %340
        %344 = vset.pattern.permute.xlu0 0
        %345 = vperm.xlu0 %344, %v299
        %v346 = vpop.permute.xlu0 %345
        %349 = vset.pattern.permute.xlu0 0
        %350 = vperm.xlu0 %349, %v300
        %v351 = vpop.permute.xlu0 %350
        %354 = vset.pattern.permute.xlu0 0
        %355 = vperm.xlu0 %354, %v301
        %v356 = vpop.permute.xlu0 %355
        %359 = vset.pattern.permute.xlu0 0
        %360 = vperm.xlu0 %359, %v302
        %v361 = vpop.permute.xlu0 %360
        %364 = vset.pattern.permute.xlu0 0
        %365 = vperm.xlu0 %364, %v303
        %v366 = vpop.permute.xlu0 %365
        %369 = vset.pattern.permute.xlu0 0
        %370 = vperm.xlu0 %369, %v304
        %v371 = vpop.permute.xlu0 %370
        %374 = vset.pattern.permute.xlu0 0
        %375 = vperm.xlu0 %374, %v305
        %v376 = vpop.permute.xlu0 %375
        %379 = vset.pattern.permute.xlu0 0
        %380 = vperm.xlu0 %379, %v306
        %v381 = vpop.permute.xlu0 %380
        %384 = vset.pattern.permute.xlu0 0
        %385 = vperm.xlu0 %384, %v307
        %v386 = vpop.permute.xlu0 %385
        %v388 = vlaneseq
        %v389 = vshrl.u32 %v388, 7
        %v390 = vsub.s32 0, %v389
        %v391 = vrot.slane %v290, %v390
        %v392 = vlaneseq
        %v393 = vshrl.u32 %v392, 7
        %v394 = vsub.s32 0, %v393
        %v395 = vrot.slane %v291, %v394
        %v396 = vadd.f32 %v311, %v391
        %v397 = vadd.f32 %v311, %v395
        %v398 = vadd.f32 %v316, %v391
        %v399 = vadd.f32 %v316, %v395
        %v400 = vadd.f32 %v321, %v391
        %v401 = vadd.f32 %v321, %v395
        %v402 = vadd.f32 %v326, %v391
        %v403 = vadd.f32 %v326, %v395
        %v404 = vadd.f32 %v331, %v391
        %v405 = vadd.f32 %v331, %v395
        %v406 = vadd.f32 %v336, %v391
        %v407 = vadd.f32 %v336, %v395
        %v408 = vadd.f32 %v341, %v391
        %v409 = vadd.f32 %v341, %v395
        %v410 = vadd.f32 %v346, %v391
        %v411 = vadd.f32 %v346, %v395
        %v412 = vadd.f32 %v351, %v391
        %v413 = vadd.f32 %v351, %v395
        %v414 = vadd.f32 %v356, %v391
        %v415 = vadd.f32 %v356, %v395
        %v416 = vadd.f32 %v361, %v391
        %v417 = vadd.f32 %v361, %v395
        %v418 = vadd.f32 %v366, %v391
        %v419 = vadd.f32 %v366, %v395
        %v420 = vadd.f32 %v371, %v391
        %v421 = vadd.f32 %v371, %v395
        %v422 = vadd.f32 %v376, %v391
        %v423 = vadd.f32 %v376, %v395
        %v424 = vadd.f32 %v381, %v391
        %v425 = vadd.f32 %v381, %v395
        %v426 = vadd.f32 %v386, %v391
        %v427 = vadd.f32 %v386, %v395
        %vm428 = vcmp.gt.f32.partialorder %v396, 0.0
        %vm429 = vcmp.gt.f32.partialorder %v397, 0.0
        %vm430 = vcmp.gt.f32.partialorder %v398, 0.0
        %vm431 = vcmp.gt.f32.partialorder %v399, 0.0
        %vm432 = vcmp.gt.f32.partialorder %v400, 0.0
        %vm433 = vcmp.gt.f32.partialorder %v401, 0.0
        %vm434 = vcmp.gt.f32.partialorder %v402, 0.0
        %vm435 = vcmp.gt.f32.partialorder %v403, 0.0
        %vm436 = vcmp.gt.f32.partialorder %v404, 0.0
        %vm437 = vcmp.gt.f32.partialorder %v405, 0.0
        %vm438 = vcmp.gt.f32.partialorder %v406, 0.0
        %vm439 = vcmp.gt.f32.partialorder %v407, 0.0
        %vm440 = vcmp.gt.f32.partialorder %v408, 0.0
        %vm441 = vcmp.gt.f32.partialorder %v409, 0.0
        %vm442 = vcmp.gt.f32.partialorder %v410, 0.0
        %vm443 = vcmp.gt.f32.partialorder %v411, 0.0
        %vm444 = vcmp.gt.f32.partialorder %v412, 0.0
        %vm445 = vcmp.gt.f32.partialorder %v413, 0.0
        %vm446 = vcmp.gt.f32.partialorder %v414, 0.0
        %vm447 = vcmp.gt.f32.partialorder %v415, 0.0
        %vm448 = vcmp.gt.f32.partialorder %v416, 0.0
        %vm449 = vcmp.gt.f32.partialorder %v417, 0.0
        %vm450 = vcmp.gt.f32.partialorder %v418, 0.0
        %vm451 = vcmp.gt.f32.partialorder %v419, 0.0
        %vm452 = vcmp.gt.f32.partialorder %v420, 0.0
        %vm453 = vcmp.gt.f32.partialorder %v421, 0.0
        %vm454 = vcmp.gt.f32.partialorder %v422, 0.0
        %vm455 = vcmp.gt.f32.partialorder %v423, 0.0
        %vm456 = vcmp.gt.f32.partialorder %v424, 0.0
        %vm457 = vcmp.gt.f32.partialorder %v425, 0.0
        %vm458 = vcmp.gt.f32.partialorder %v426, 0.0
        %vm459 = vcmp.gt.f32.partialorder %v427, 0.0
        %v460 = vmul.f32 %v396, 0.2
        %v461 = vmul.f32 %v397, 0.2
        %v462 = vmul.f32 %v398, 0.2
        %v463 = vmul.f32 %v399, 0.2
        %v464 = vmul.f32 %v400, 0.2
        %v465 = vmul.f32 %v401, 0.2
        %v466 = vmul.f32 %v402, 0.2
        %v467 = vmul.f32 %v403, 0.2
        %v468 = vmul.f32 %v404, 0.2
        %v469 = vmul.f32 %v405, 0.2
        %v470 = vmul.f32 %v406, 0.2
        %v471 = vmul.f32 %v407, 0.2
        %v472 = vmul.f32 %v408, 0.2
        %v473 = vmul.f32 %v409, 0.2
        %v474 = vmul.f32 %v410, 0.2
        %v475 = vmul.f32 %v411, 0.2
        %v476 = vmul.f32 %v412, 0.2
        %v477 = vmul.f32 %v413, 0.2
        %v478 = vmul.f32 %v414, 0.2
        %v479 = vmul.f32 %v415, 0.2
        %v480 = vmul.f32 %v416, 0.2
        %v481 = vmul.f32 %v417, 0.2
        %v482 = vmul.f32 %v418, 0.2
        %v483 = vmul.f32 %v419, 0.2
        %v484 = vmul.f32 %v420, 0.2
        %v485 = vmul.f32 %v421, 0.2
        %v486 = vmul.f32 %v422, 0.2
        %v487 = vmul.f32 %v423, 0.2
        %v488 = vmul.f32 %v424, 0.2
        %v489 = vmul.f32 %v425, 0.2
        %v490 = vmul.f32 %v426, 0.2
        %v491 = vmul.f32 %v427, 0.2
        %v492 = vsel %vm428, %v396, %v460
        %v493 = vsel %vm429, %v397, %v461
        %v494 = vsel %vm430, %v398, %v462
        %v495 = vsel %vm431, %v399, %v463
        %v496 = vsel %vm432, %v400, %v464
        %v497 = vsel %vm433, %v401, %v465
        %v498 = vsel %vm434, %v402, %v466
        %v499 = vsel %vm435, %v403, %v467
        %v500 = vsel %vm436, %v404, %v468
        %v501 = vsel %vm437, %v405, %v469
        %v502 = vsel %vm438, %v406, %v470
        %v503 = vsel %vm439, %v407, %v471
        %v504 = vsel %vm440, %v408, %v472
        %v505 = vsel %vm441, %v409, %v473
        %v506 = vsel %vm442, %v410, %v474
        %v507 = vsel %vm443, %v411, %v475
        %v508 = vsel %vm444, %v412, %v476
        %v509 = vsel %vm445, %v413, %v477
        %v510 = vsel %vm446, %v414, %v478
        %v511 = vsel %vm447, %v415, %v479
        %v512 = vsel %vm448, %v416, %v480
        %v513 = vsel %vm449, %v417, %v481
        %v514 = vsel %vm450, %v418, %v482
        %v515 = vsel %vm451, %v419, %v483
        %v516 = vsel %vm452, %v420, %v484
        %v517 = vsel %vm453, %v421, %v485
        %v518 = vsel %vm454, %v422, %v486
        %v519 = vsel %vm455, %v423, %v487
        %v520 = vsel %vm456, %v424, %v488
        %v521 = vsel %vm457, %v425, %v489
        %v522 = vsel %vm458, %v426, %v490
        %v523 = vsel %vm459, %v427, %v491
        %v524 = vld [vmem:[%s254] sm:$0xff]
        %v525 = vld [vmem:[%s254 + $0x8] sm:$0xff]
        %v526 = vld [vmem:[%s254 + $0x10] sm:$0xff]
        %v527 = vld [vmem:[%s254 + $0x18] sm:$0xff]
        %v528 = vld [vmem:[%s254 + $0x20] sm:$0xff]
        %v529 = vld [vmem:[%s254 + $0x28] sm:$0xff]
        %v530 = vld [vmem:[%s254 + $0x30] sm:$0xff]
        %v531 = vld [vmem:[%s254 + $0x38] sm:$0xff]
        %vm532 = vnez %v524
        %vm533 = vnez %v525
        %vm534 = vnez %v526
        %vm535 = vnez %v527
        %vm536 = vnez %v528
        %vm537 = vnez %v529
        %vm538 = vnez %v530
        %vm539 = vnez %v531
        %v540 = vsel %vm532, 16843009, 0
        %v541 = vsel %vm533, 16843009, 0
        %v542 = vsel %vm534, 16843009, 0
        %v543 = vsel %vm535, 16843009, 0
        %v544 = vsel %vm536, 16843009, 0
        %v545 = vsel %vm537, 16843009, 0
        %v546 = vsel %vm538, 16843009, 0
        %v547 = vsel %vm539, 16843009, 0
        %v548 = vunpack.c.0.s8 %v540
        %v549 = vunpack.c.0.s8 %v541
        %v550 = vunpack.c.1.s8 %v540
        %v551 = vunpack.c.1.s8 %v541
        %v552 = vunpack.c.2.s8 %v540
        %v553 = vunpack.c.2.s8 %v541
        %v554 = vunpack.c.3.s8 %v540
        %v555 = vunpack.c.3.s8 %v541
        %v556 = vunpack.c.0.s8 %v542
        %v557 = vunpack.c.0.s8 %v543
        %v558 = vunpack.c.1.s8 %v542
        %v559 = vunpack.c.1.s8 %v543
        %v560 = vunpack.c.2.s8 %v542
        %v561 = vunpack.c.2.s8 %v543
        %v562 = vunpack.c.3.s8 %v542
        %v563 = vunpack.c.3.s8 %v543
        %v564 = vunpack.c.0.s8 %v544
        %v565 = vunpack.c.0.s8 %v545
        %v566 = vunpack.c.1.s8 %v544
        %v567 = vunpack.c.1.s8 %v545
        %v568 = vunpack.c.2.s8 %v544
        %v569 = vunpack.c.2.s8 %v545
        %v570 = vunpack.c.3.s8 %v544
        %v571 = vunpack.c.3.s8 %v545
        %v572 = vunpack.c.0.s8 %v546
        %v573 = vunpack.c.0.s8 %v547
        %v574 = vunpack.c.1.s8 %v546
        %v575 = vunpack.c.1.s8 %v547
        %v576 = vunpack.c.2.s8 %v546
        %v577 = vunpack.c.2.s8 %v547
        %v578 = vunpack.c.3.s8 %v546
        %v579 = vunpack.c.3.s8 %v547
        %v580 = vpack.c.b16 %v549, %v548
        %v581 = vpack.c.b8 %v580, %v580
        %v582 = vpack.c.b16 %v551, %v550
        %v583 = vpack.c.b8 %v582, %v582
        %v584 = vpack.c.b16 %v553, %v552
        %v585 = vpack.c.b8 %v584, %v584
        %v586 = vpack.c.b16 %v555, %v554
        %v587 = vpack.c.b8 %v586, %v586
        %v588 = vpack.c.b16 %v557, %v556
        %v589 = vpack.c.b8 %v588, %v588
        %v590 = vpack.c.b16 %v559, %v558
        %v591 = vpack.c.b8 %v590, %v590
        %v592 = vpack.c.b16 %v561, %v560
        %v593 = vpack.c.b8 %v592, %v592
        %v594 = vpack.c.b16 %v563, %v562
        %v595 = vpack.c.b8 %v594, %v594
        %v596 = vpack.c.b16 %v565, %v564
        %v597 = vpack.c.b8 %v596, %v596
        %v598 = vpack.c.b16 %v567, %v566
        %v599 = vpack.c.b8 %v598, %v598
        %v600 = vpack.c.b16 %v569, %v568
        %v601 = vpack.c.b8 %v600, %v600
        %v602 = vpack.c.b16 %v571, %v570
        %v603 = vpack.c.b8 %v602, %v602
        %v604 = vpack.c.b16 %v573, %v572
        %v605 = vpack.c.b8 %v604, %v604
        %v606 = vpack.c.b16 %v575, %v574
        %v607 = vpack.c.b8 %v606, %v606
        %v608 = vpack.c.b16 %v577, %v576
        %v609 = vpack.c.b8 %v608, %v608
        %v610 = vpack.c.b16 %v579, %v578
        %v611 = vpack.c.b8 %v610, %v610
        %vm612 = vnez %v581
        %vm613 = vnez %v583
        %vm614 = vnez %v585
        %vm615 = vnez %v587
        %vm616 = vnez %v589
        %vm617 = vnez %v591
        %vm618 = vnez %v593
        %vm619 = vnez %v595
        %vm620 = vnez %v597
        %vm621 = vnez %v599
        %vm622 = vnez %v601
        %vm623 = vnez %v603
        %vm624 = vnez %v605
        %vm625 = vnez %v607
        %vm626 = vnez %v609
        %vm627 = vnez %v611
        %v628 = vsel %vm612, 16843009, 0
        %v629 = vsel %vm613, 16843009, 0
        %v630 = vsel %vm614, 16843009, 0
        %v631 = vsel %vm615, 16843009, 0
        %v632 = vsel %vm616, 16843009, 0
        %v633 = vsel %vm617, 16843009, 0
        %v634 = vsel %vm618, 16843009, 0
        %v635 = vsel %vm619, 16843009, 0
        %v636 = vsel %vm620, 16843009, 0
        %v637 = vsel %vm621, 16843009, 0
        %v638 = vsel %vm622, 16843009, 0
        %v639 = vsel %vm623, 16843009, 0
        %v640 = vsel %vm624, 16843009, 0
        %v641 = vsel %vm625, 16843009, 0
        %v642 = vsel %vm626, 16843009, 0
        %v643 = vsel %vm627, 16843009, 0
        %v644 = vunpack.c.0.s8 %v628
        %v645 = vunpack.c.1.s8 %v628
        %v646 = vunpack.c.0.s8 %v629
        %v647 = vunpack.c.1.s8 %v629
        %v648 = vunpack.c.0.s8 %v630
        %v649 = vunpack.c.1.s8 %v630
        %v650 = vunpack.c.0.s8 %v631
        %v651 = vunpack.c.1.s8 %v631
        %v652 = vunpack.c.0.s8 %v632
        %v653 = vunpack.c.1.s8 %v632
        %v654 = vunpack.c.0.s8 %v633
        %v655 = vunpack.c.1.s8 %v633
        %v656 = vunpack.c.0.s8 %v634
        %v657 = vunpack.c.1.s8 %v634
        %v658 = vunpack.c.0.s8 %v635
        %v659 = vunpack.c.1.s8 %v635
        %v660 = vunpack.c.0.s8 %v636
        %v661 = vunpack.c.1.s8 %v636
        %v662 = vunpack.c.0.s8 %v637
        %v663 = vunpack.c.1.s8 %v637
        %v664 = vunpack.c.0.s8 %v638
        %v665 = vunpack.c.1.s8 %v638
        %v666 = vunpack.c.0.s8 %v639
        %v667 = vunpack.c.1.s8 %v639
        %v668 = vunpack.c.0.s8 %v640
        %v669 = vunpack.c.1.s8 %v640
        %v670 = vunpack.c.0.s8 %v641
        %v671 = vunpack.c.1.s8 %v641
        %v672 = vunpack.c.0.s8 %v642
        %v673 = vunpack.c.1.s8 %v642
        %v674 = vunpack.c.0.s8 %v643
        %v675 = vunpack.c.1.s8 %v643
        %vm676 = vcmp.ne.s32.totalorder %v644, 0
        %vm677 = vcmp.ne.s32.totalorder %v645, 0
        %vm678 = vcmp.ne.s32.totalorder %v646, 0
        %vm679 = vcmp.ne.s32.totalorder %v647, 0
        %vm680 = vcmp.ne.s32.totalorder %v648, 0
        %vm681 = vcmp.ne.s32.totalorder %v649, 0
        %vm682 = vcmp.ne.s32.totalorder %v650, 0
        %vm683 = vcmp.ne.s32.totalorder %v651, 0
        %vm684 = vcmp.ne.s32.totalorder %v652, 0
        %vm685 = vcmp.ne.s32.totalorder %v653, 0
        %vm686 = vcmp.ne.s32.totalorder %v654, 0
        %vm687 = vcmp.ne.s32.totalorder %v655, 0
        %vm688 = vcmp.ne.s32.totalorder %v656, 0
        %vm689 = vcmp.ne.s32.totalorder %v657, 0
        %vm690 = vcmp.ne.s32.totalorder %v658, 0
        %vm691 = vcmp.ne.s32.totalorder %v659, 0
        %vm692 = vcmp.ne.s32.totalorder %v660, 0
        %vm693 = vcmp.ne.s32.totalorder %v661, 0
        %vm694 = vcmp.ne.s32.totalorder %v662, 0
        %vm695 = vcmp.ne.s32.totalorder %v663, 0
        %vm696 = vcmp.ne.s32.totalorder %v664, 0
        %vm697 = vcmp.ne.s32.totalorder %v665, 0
        %vm698 = vcmp.ne.s32.totalorder %v666, 0
        %vm699 = vcmp.ne.s32.totalorder %v667, 0
        %vm700 = vcmp.ne.s32.totalorder %v668, 0
        %vm701 = vcmp.ne.s32.totalorder %v669, 0
        %vm702 = vcmp.ne.s32.totalorder %v670, 0
        %vm703 = vcmp.ne.s32.totalorder %v671, 0
        %vm704 = vcmp.ne.s32.totalorder %v672, 0
        %vm705 = vcmp.ne.s32.totalorder %v673, 0
        %vm706 = vcmp.ne.s32.totalorder %v674, 0
        %vm707 = vcmp.ne.s32.totalorder %v675, 0
        %v708 = vsel %vm676, %v492, -9e+15
        %v709 = vsel %vm677, %v493, -9e+15
        %v710 = vsel %vm678, %v494, -9e+15
        %v711 = vsel %vm679, %v495, -9e+15
        %v712 = vsel %vm680, %v496, -9e+15
        %v713 = vsel %vm681, %v497, -9e+15
        %v714 = vsel %vm682, %v498, -9e+15
        %v715 = vsel %vm683, %v499, -9e+15
        %v716 = vsel %vm684, %v500, -9e+15
        %v717 = vsel %vm685, %v501, -9e+15
        %v718 = vsel %vm686, %v502, -9e+15
        %v719 = vsel %vm687, %v503, -9e+15
        %v720 = vsel %vm688, %v504, -9e+15
        %v721 = vsel %vm689, %v505, -9e+15
        %v722 = vsel %vm690, %v506, -9e+15
        %v723 = vsel %vm691, %v507, -9e+15
        %v724 = vsel %vm692, %v508, -9e+15
        %v725 = vsel %vm693, %v509, -9e+15
        %v726 = vsel %vm694, %v510, -9e+15
        %v727 = vsel %vm695, %v511, -9e+15
        %v728 = vsel %vm696, %v512, -9e+15
        %v729 = vsel %vm697, %v513, -9e+15
        %v730 = vsel %vm698, %v514, -9e+15
        %v731 = vsel %vm699, %v515, -9e+15
        %v732 = vsel %vm700, %v516, -9e+15
        %v733 = vsel %vm701, %v517, -9e+15
        %v734 = vsel %vm702, %v518, -9e+15
        %v735 = vsel %vm703, %v519, -9e+15
        %v736 = vsel %vm704, %v520, -9e+15
        %v737 = vsel %vm705, %v521, -9e+15
        %v738 = vsel %vm706, %v522, -9e+15
        %v739 = vsel %vm707, %v523, -9e+15
        %v740 = vmax.f32 %v708, %v709
        %741 = vmax.xlane.f32.xlu0 %v740
        %v742 = vpop.xlane.xlu0 %741
        %v743 = vmax.f32 %v710, %v711
        %744 = vmax.xlane.f32.xlu0 %v743
        %v745 = vpop.xlane.xlu0 %744
        %v746 = vmax.f32 %v712, %v713
        %747 = vmax.xlane.f32.xlu0 %v746
        %v748 = vpop.xlane.xlu0 %747
        %v749 = vmax.f32 %v714, %v715
        %750 = vmax.xlane.f32.xlu0 %v749
        %v751 = vpop.xlane.xlu0 %750
        %v752 = vmax.f32 %v716, %v717
        %753 = vmax.xlane.f32.xlu0 %v752
        %v754 = vpop.xlane.xlu0 %753
        %v755 = vmax.f32 %v718, %v719
        %756 = vmax.xlane.f32.xlu0 %v755
        %v757 = vpop.xlane.xlu0 %756
        %v758 = vmax.f32 %v720, %v721
        %759 = vmax.xlane.f32.xlu0 %v758
        %v760 = vpop.xlane.xlu0 %759
        %v761 = vmax.f32 %v722, %v723
        %762 = vmax.xlane.f32.xlu0 %v761
        %v763 = vpop.xlane.xlu0 %762
        %v764 = vmax.f32 %v724, %v725
        %765 = vmax.xlane.f32.xlu0 %v764
        %v766 = vpop.xlane.xlu0 %765
        %v767 = vmax.f32 %v726, %v727
        %768 = vmax.xlane.f32.xlu0 %v767
        %v769 = vpop.xlane.xlu0 %768
        %v770 = vmax.f32 %v728, %v729
        %771 = vmax.xlane.f32.xlu0 %v770
        %v772 = vpop.xlane.xlu0 %771
        %v773 = vmax.f32 %v730, %v731
        %774 = vmax.xlane.f32.xlu0 %v773
        %v775 = vpop.xlane.xlu0 %774
        %v776 = vmax.f32 %v732, %v733
        %777 = vmax.xlane.f32.xlu0 %v776
        %v778 = vpop.xlane.xlu0 %777
        %v779 = vmax.f32 %v734, %v735
        %780 = vmax.xlane.f32.xlu0 %v779
        %v781 = vpop.xlane.xlu0 %780
        %v782 = vmax.f32 %v736, %v737
        %783 = vmax.xlane.f32.xlu0 %v782
        %v784 = vpop.xlane.xlu0 %783
        %v785 = vmax.f32 %v738, %v739
        %786 = vmax.xlane.f32.xlu0 %v785
        %v787 = vpop.xlane.xlu0 %786
        %v788 = vsub.f32 %v708, %v742
        %v789 = vsub.f32 %v709, %v742
        %v790 = vsub.f32 %v710, %v745
        %v791 = vsub.f32 %v711, %v745
        %v792 = vsub.f32 %v712, %v748
        %v793 = vsub.f32 %v713, %v748
        %v794 = vsub.f32 %v714, %v751
        %v795 = vsub.f32 %v715, %v751
        %v796 = vsub.f32 %v716, %v754
        %v797 = vsub.f32 %v717, %v754
        %v798 = vsub.f32 %v718, %v757
        %v799 = vsub.f32 %v719, %v757
        %v800 = vsub.f32 %v720, %v760
        %v801 = vsub.f32 %v721, %v760
        %v802 = vsub.f32 %v722, %v763
        %v803 = vsub.f32 %v723, %v763
        %v804 = vsub.f32 %v724, %v766
        %v805 = vsub.f32 %v725, %v766
        %v806 = vsub.f32 %v726, %v769
        %v807 = vsub.f32 %v727, %v769
        %v808 = vsub.f32 %v728, %v772
        %v809 = vsub.f32 %v729, %v772
        %v810 = vsub.f32 %v730, %v775
        %v811 = vsub.f32 %v731, %v775
        %v812 = vsub.f32 %v732, %v778
        %v813 = vsub.f32 %v733, %v778
        %v814 = vsub.f32 %v734, %v781
        %v815 = vsub.f32 %v735, %v781
        %v816 = vsub.f32 %v736, %v784
        %v817 = vsub.f32 %v737, %v784
        %v818 = vsub.f32 %v738, %v787
        %v819 = vsub.f32 %v739, %v787
        %v820 = vmul.f32 %v788, 1.442695
        %v821 = vpow.pop %v820
        %v822 = vmul.f32 %v789, 1.442695
        %v823 = vpow.pop %v822
        %v824 = vmul.f32 %v790, 1.442695
        %v825 = vpow.pop %v824
        %v826 = vmul.f32 %v791, 1.442695
        %v827 = vpow.pop %v826
        %v828 = vmul.f32 %v792, 1.442695
        %v829 = vpow.pop %v828
        %v830 = vmul.f32 %v793, 1.442695
        %v831 = vpow.pop %v830
        %v832 = vmul.f32 %v794, 1.442695
        %v833 = vpow.pop %v832
        %v834 = vmul.f32 %v795, 1.442695
        %v835 = vpow.pop %v834
        %v836 = vmul.f32 %v796, 1.442695
        %v837 = vpow.pop %v836
        %v838 = vmul.f32 %v797, 1.442695
        %v839 = vpow.pop %v838
        %v840 = vmul.f32 %v798, 1.442695
        %v841 = vpow.pop %v840
        %v842 = vmul.f32 %v799, 1.442695
        %v843 = vpow.pop %v842
        %v844 = vmul.f32 %v800, 1.442695
        %v845 = vpow.pop %v844
        %v846 = vmul.f32 %v801, 1.442695
        %v847 = vpow.pop %v846
        %v848 = vmul.f32 %v802, 1.442695
        %v849 = vpow.pop %v848
        %v850 = vmul.f32 %v803, 1.442695
        %v851 = vpow.pop %v850
        %v852 = vmul.f32 %v804, 1.442695
        %v853 = vpow.pop %v852
        %v854 = vmul.f32 %v805, 1.442695
        %v855 = vpow.pop %v854
        %v856 = vmul.f32 %v806, 1.442695
        %v857 = vpow.pop %v856
        %v858 = vmul.f32 %v807, 1.442695
        %v859 = vpow.pop %v858
        %v860 = vmul.f32 %v808, 1.442695
        %v861 = vpow.pop %v860
        %v862 = vmul.f32 %v809, 1.442695
        %v863 = vpow.pop %v862
        %v864 = vmul.f32 %v810, 1.442695
        %v865 = vpow.pop %v864
        %v866 = vmul.f32 %v811, 1.442695
        %v867 = vpow.pop %v866
        %v868 = vmul.f32 %v812, 1.442695
        %v869 = vpow.pop %v868
        %v870 = vmul.f32 %v813, 1.442695
        %v871 = vpow.pop %v870
        %v872 = vmul.f32 %v814, 1.442695
        %v873 = vpow.pop %v872
        %v874 = vmul.f32 %v815, 1.442695
        %v875 = vpow.pop %v874
        %v876 = vmul.f32 %v816, 1.442695
        %v877 = vpow.pop %v876
        %v878 = vmul.f32 %v817, 1.442695
        %v879 = vpow.pop %v878
        %v880 = vmul.f32 %v818, 1.442695
        %v881 = vpow.pop %v880
        %v882 = vmul.f32 %v819, 1.442695
        %v883 = vpow.pop %v882
        %v884 = vpack.c.bf16 %v825, %v821
        %v885 = vpack.c.bf16 %v827, %v823
        %v886 = vpack.c.bf16 %v833, %v829
        %v887 = vpack.c.bf16 %v835, %v831
        %v888 = vpack.c.bf16 %v841, %v837
        %v889 = vpack.c.bf16 %v843, %v839
        %v890 = vpack.c.bf16 %v849, %v845
        %v891 = vpack.c.bf16 %v851, %v847
        %v892 = vpack.c.bf16 %v857, %v853
        %v893 = vpack.c.bf16 %v859, %v855
        %v894 = vpack.c.bf16 %v865, %v861
        %v895 = vpack.c.bf16 %v867, %v863
        %v896 = vpack.c.bf16 %v873, %v869
        %v897 = vpack.c.bf16 %v875, %v871
        %v898 = vpack.c.bf16 %v881, %v877
        %v899 = vpack.c.bf16 %v883, %v879
        %v900 = vld [vmem:[#allocation7] sm:$0xf]
        %v901 = vld [vmem:[#allocation7 + $0x4] sm:$0xf]
        %v902 = vld [vmem:[#allocation7 + $0x8] sm:$0xf]
        %v903 = vld [vmem:[#allocation7 + $0xc] sm:$0xf]
        %v904 = vld [vmem:[#allocation7 + $0x10] sm:$0xf]
        %v905 = vld [vmem:[#allocation7 + $0x14] sm:$0xf]
        %v906 = vld [vmem:[#allocation7 + $0x18] sm:$0xf]
        %v907 = vld [vmem:[#allocation7 + $0x1c] sm:$0xf]
        %v908 = vld [vmem:[#allocation7 + $0x20] sm:$0xf]
        %v909 = vld [vmem:[#allocation7 + $0x24] sm:$0xf]
        %v910 = vld [vmem:[#allocation7 + $0x28] sm:$0xf]
        %v911 = vld [vmem:[#allocation7 + $0x2c] sm:$0xf]
        %v912 = vld [vmem:[#allocation7 + $0x30] sm:$0xf]
        %v913 = vld [vmem:[#allocation7 + $0x34] sm:$0xf]
        %v914 = vld [vmem:[#allocation7 + $0x38] sm:$0xf]
        %v915 = vld [vmem:[#allocation7 + $0x3c] sm:$0xf]
        %v916 = vld [vmem:[#allocation7 + $0x40] sm:$0xf]
        %v917 = vld [vmem:[#allocation7 + $0x44] sm:$0xf]
        %v918 = vld [vmem:[#allocation7 + $0x48] sm:$0xf]
        %v919 = vld [vmem:[#allocation7 + $0x4c] sm:$0xf]
        %v920 = vld [vmem:[#allocation7 + $0x50] sm:$0xf]
        %v921 = vld [vmem:[#allocation7 + $0x54] sm:$0xf]
        %v922 = vld [vmem:[#allocation7 + $0x58] sm:$0xf]
        %v923 = vld [vmem:[#allocation7 + $0x5c] sm:$0xf]
        %v924 = vld [vmem:[#allocation7 + $0x60] sm:$0xf]
        %v925 = vld [vmem:[#allocation7 + $0x64] sm:$0xf]
        %v926 = vld [vmem:[#allocation7 + $0x68] sm:$0xf]
        %v927 = vld [vmem:[#allocation7 + $0x6c] sm:$0xf]
        %v928 = vld [vmem:[#allocation7 + $0x70] sm:$0xf]
        %v929 = vld [vmem:[#allocation7 + $0x74] sm:$0xf]
        %v930 = vld [vmem:[#allocation7 + $0x78] sm:$0xf]
        %v931 = vld [vmem:[#allocation7 + $0x7c] sm:$0xf]
        %v964 = vunpack.c.l.b16 %v900
        %v965 = vunpack.c.l.b16 %v901
        %v966 = vunpack.c.l.b16 %v902
        %v967 = vunpack.c.l.b16 %v903
        %v968 = vunpack.c.l.b16 %v904
        %v969 = vunpack.c.l.b16 %v905
        %v970 = vunpack.c.l.b16 %v906
        %v971 = vunpack.c.l.b16 %v907
        %v972 = vunpack.c.l.b16 %v908
        %v973 = vunpack.c.l.b16 %v909
        %v974 = vunpack.c.l.b16 %v910
        %v975 = vunpack.c.l.b16 %v911
        %v976 = vunpack.c.l.b16 %v912
        %v977 = vunpack.c.l.b16 %v913
        %v978 = vunpack.c.l.b16 %v914
        %v979 = vunpack.c.l.b16 %v915
        %v980 = vunpack.c.l.b16 %v916
        %v981 = vunpack.c.l.b16 %v917
        %v982 = vunpack.c.l.b16 %v918
        %v983 = vunpack.c.l.b16 %v919
        %v984 = vunpack.c.l.b16 %v920
        %v985 = vunpack.c.l.b16 %v921
        %v986 = vunpack.c.l.b16 %v922
        %v987 = vunpack.c.l.b16 %v923
        %v988 = vunpack.c.l.b16 %v924
        %v989 = vunpack.c.l.b16 %v925
        %v990 = vunpack.c.l.b16 %v926
        %v991 = vunpack.c.l.b16 %v927
        %v992 = vunpack.c.l.b16 %v928
        %v993 = vunpack.c.l.b16 %v929
        %v994 = vunpack.c.l.b16 %v930
        %v995 = vunpack.c.l.b16 %v931
        %v996 = vpack.c.b16 %v965, %v964
        %v997 = vpack.c.b16 %v967, %v966
        %v998 = vpack.c.b16 %v969, %v968
        %v999 = vpack.c.b16 %v971, %v970
        %v1000 = vpack.c.b16 %v973, %v972
        %v1001 = vpack.c.b16 %v975, %v974
        %v1002 = vpack.c.b16 %v977, %v976
        %v1003 = vpack.c.b16 %v979, %v978
        %v1004 = vpack.c.b16 %v981, %v980
        %v1005 = vpack.c.b16 %v983, %v982
        %v1006 = vpack.c.b16 %v985, %v984
        %v1007 = vpack.c.b16 %v987, %v986
        %v1008 = vpack.c.b16 %v989, %v988
        %v1009 = vpack.c.b16 %v991, %v990
        %v1010 = vpack.c.b16 %v993, %v992
        %v1011 = vpack.c.b16 %v995, %v994
        %1028 = vmatprep.subr.bf16.mxu0 0
        %1029 = vmatpush1.bf16.msra.mxu0 %v996
        %1030 = vmatprep.subr.bf16.mxu0 0
        %1031 = vmatpush1.bf16.msra.mxu0 %v997
        %1032 = vmatprep.subr.bf16.mxu0 0
        %1033 = vmatpush1.bf16.msra.mxu0 %v998
        %1034 = vmatprep.subr.bf16.mxu0 0
        %1035 = vmatpush1.bf16.msra.mxu0 %v999
        %1036 = vmatprep.subr.bf16.mxu0 0
        %1037 = vmatpush1.bf16.msra.mxu0 %v1000
        %1038 = vmatprep.subr.bf16.mxu0 0
        %1039 = vmatpush1.bf16.msra.mxu0 %v1001
        %1040 = vmatprep.subr.bf16.mxu0 0
        %1041 = vmatpush1.bf16.msra.mxu0 %v1002
        %1042 = vmatprep.subr.bf16.mxu0 0
        %1043 = vmatpush1.bf16.msra.mxu0 %v1003
        %1044 = vmatprep.subr.bf16.mxu0 0
        %1045 = vmatpush1.bf16.msra.mxu0 %v1004
        %1046 = vmatprep.subr.bf16.mxu0 0
        %1047 = vmatpush1.bf16.msra.mxu0 %v1005
        %1048 = vmatprep.subr.bf16.mxu0 0
        %1049 = vmatpush1.bf16.msra.mxu0 %v1006
        %1050 = vmatprep.subr.bf16.mxu0 0
        %1051 = vmatpush1.bf16.msra.mxu0 %v1007
        %1052 = vmatprep.subr.bf16.mxu0 0
        %1053 = vmatpush1.bf16.msra.mxu0 %v1008
        %1054 = vmatprep.subr.bf16.mxu0 0
        %1055 = vmatpush1.bf16.msra.mxu0 %v1009
        %1056 = vmatprep.subr.bf16.mxu0 0
        %1057 = vmatpush1.bf16.msra.mxu0 %v1010
        %1058 = vmatprep.subr.bf16.mxu0 0
        %1059 = vmatpush1.bf16.msra.mxu0 %v1011
        %1060 = vmatprep.mubr.bf16.mxu0 %v885
        %1061 = vmatmul.mubr.bf16.gmra.mrb[0].mxu0 %v884
        %v1062 = vpop.f32.mrb[0].mxu0
        %v1063 = vadd.f32 0.0, %v1062
        %v1064 = vpop.f32.mrb[0].mxu0
        %v1065 = vpop.f32.mrb[0].mxu0
        %v1066 = vadd.f32 0.0, %v1065
        %v1067 = vpop.f32.mrb[0].mxu0
        %1068 = vmatprep.mubr.bf16.mxu0 %v887
        %1069 = vmatmul.mubr.bf16.gmra.mrb[0].mxu0 %v886
        %v1070 = vpop.f32.mrb[0].mxu0
        %v1071 = vadd.f32 0.0, %v1070
        %v1072 = vpop.f32.mrb[0].mxu0
        %v1073 = vpop.f32.mrb[0].mxu0
        %v1074 = vadd.f32 0.0, %v1073
        %v1075 = vpop.f32.mrb[0].mxu0
        %1076 = vmatprep.mubr.bf16.mxu0 %v889
        %1077 = vmatmul.mubr.bf16.gmra.mrb[0].mxu0 %v888
        %v1078 = vpop.f32.mrb[0].mxu0
        %v1079 = vadd.f32 0.0, %v1078
        %v1080 = vpop.f32.mrb[0].mxu0
        %v1081 = vpop.f32.mrb[0].mxu0
        %v1082 = vadd.f32 0.0, %v1081
        %v1083 = vpop.f32.mrb[0].mxu0
        %1084 = vmatprep.mubr.bf16.mxu0 %v891
        %1085 = vmatmul.mubr.bf16.gmra.mrb[0].mxu0 %v890
        %v1086 = vpop.f32.mrb[0].mxu0
        %v1087 = vadd.f32 0.0, %v1086
        %v1088 = vpop.f32.mrb[0].mxu0
        %v1089 = vpop.f32.mrb[0].mxu0
        %v1090 = vadd.f32 0.0, %v1089
        %v1091 = vpop.f32.mrb[0].mxu0
        %1092 = vmatprep.mubr.bf16.mxu0 %v893
        %1093 = vmatmul.mubr.bf16.gmra.mrb[0].mxu0 %v892
        %v1094 = vpop.f32.mrb[0].mxu0
        %v1095 = vadd.f32 0.0, %v1094
        %v1096 = vpop.f32.mrb[0].mxu0
        %v1097 = vpop.f32.mrb[0].mxu0
        %v1098 = vadd.f32 0.0, %v1097
        %v1099 = vpop.f32.mrb[0].mxu0
        %1100 = vmatprep.mubr.bf16.mxu0 %v895
        %1101 = vmatmul.mubr.bf16.gmra.mrb[0].mxu0 %v894
        %v1102 = vpop.f32.mrb[0].mxu0
        %v1103 = vadd.f32 0.0, %v1102
        %v1104 = vpop.f32.mrb[0].mxu0
        %v1105 = vpop.f32.mrb[0].mxu0
        %v1106 = vadd.f32 0.0, %v1105
        %v1107 = vpop.f32.mrb[0].mxu0
        %1108 = vmatprep.mubr.bf16.mxu0 %v897
        %1109 = vmatmul.mubr.bf16.gmra.mrb[0].mxu0 %v896
        %v1110 = vpop.f32.mrb[0].mxu0
        %v1111 = vadd.f32 0.0, %v1110
        %v1112 = vpop.f32.mrb[0].mxu0
        %v1113 = vpop.f32.mrb[0].mxu0
        %v1114 = vadd.f32 0.0, %v1113
        %v1115 = vpop.f32.mrb[0].mxu0
        %1116 = vmatprep.mubr.bf16.mxu0 %v899
        %1117 = vmatmul.mubr.bf16.gmra.mrb[0].mxu0 %v898
        %v1118 = vpop.f32.mrb[0].mxu0
        %v1119 = vadd.f32 0.0, %v1118
        %v1120 = vpop.f32.mrb[0].mxu0
        %v1121 = vpop.f32.mrb[0].mxu0
        %v1122 = vadd.f32 0.0, %v1121
        %v1123 = vpop.f32.mrb[0].mxu0
        %1124 = vdwg.mxu0
        %v1125 = vrcp.pop %v1063
        %v1126 = vrcp.pop %v1066
        %v1127 = vrcp.pop %v1071
        %v1128 = vrcp.pop %v1074
        %v1129 = vrcp.pop %v1079
        %v1130 = vrcp.pop %v1082
        %v1131 = vrcp.pop %v1087
        %v1132 = vrcp.pop %v1090
        %v1133 = vrcp.pop %v1095
        %v1134 = vrcp.pop %v1098
        %v1135 = vrcp.pop %v1103
        %v1136 = vrcp.pop %v1106
        %v1137 = vrcp.pop %v1111
        %v1138 = vrcp.pop %v1114
        %v1139 = vrcp.pop %v1119
        %v1140 = vrcp.pop %v1122
        %1142 = vset.pattern.permute.xlu0 32
        %1143 = vperm.xlu0 %1142, %v1125
        %v1144 = vpop.permute.xlu0 %1143
        %1147 = vset.pattern.permute.xlu0 32
        %1148 = vperm.xlu0 %1147, %v1126
        %v1149 = vpop.permute.xlu0 %1148
        %1152 = vset.pattern.permute.xlu0 32
        %1153 = vperm.xlu0 %1152, %v1127
        %v1154 = vpop.permute.xlu0 %1153
        %1157 = vset.pattern.permute.xlu0 32
        %1158 = vperm.xlu0 %1157, %v1128
        %v1159 = vpop.permute.xlu0 %1158
        %1162 = vset.pattern.permute.xlu0 32
        %1163 = vperm.xlu0 %1162, %v1129
        %v1164 = vpop.permute.xlu0 %1163
        %1167 = vset.pattern.permute.xlu0 32
        %1168 = vperm.xlu0 %1167, %v1130
        %v1169 = vpop.permute.xlu0 %1168
        %1172 = vset.pattern.permute.xlu0 32
        %1173 = vperm.xlu0 %1172, %v1131
        %v1174 = vpop.permute.xlu0 %1173
        %1177 = vset.pattern.permute.xlu0 32
        %1178 = vperm.xlu0 %1177, %v1132
        %v1179 = vpop.permute.xlu0 %1178
        %1182 = vset.pattern.permute.xlu0 32
        %1183 = vperm.xlu0 %1182, %v1133
        %v1184 = vpop.permute.xlu0 %1183
        %1187 = vset.pattern.permute.xlu0 32
        %1188 = vperm.xlu0 %1187, %v1134
        %v1189 = vpop.permute.xlu0 %1188
        %1192 = vset.pattern.permute.xlu0 32
        %1193 = vperm.xlu0 %1192, %v1135
        %v1194 = vpop.permute.xlu0 %1193
        %1197 = vset.pattern.permute.xlu0 32
        %1198 = vperm.xlu0 %1197, %v1136
        %v1199 = vpop.permute.xlu0 %1198
        %1202 = vset.pattern.permute.xlu0 32
        %1203 = vperm.xlu0 %1202, %v1137
        %v1204 = vpop.permute.xlu0 %1203
        %1207 = vset.pattern.permute.xlu0 32
        %1208 = vperm.xlu0 %1207, %v1138
        %v1209 = vpop.permute.xlu0 %1208
        %1212 = vset.pattern.permute.xlu0 32
        %1213 = vperm.xlu0 %1212, %v1139
        %v1214 = vpop.permute.xlu0 %1213
        %1217 = vset.pattern.permute.xlu0 32
        %1218 = vperm.xlu0 %1217, %v1140
        %v1219 = vpop.permute.xlu0 %1218
        %v1221 = vmul.f32 %v1063, %v1144
        %v1222 = vmul.f32 %v1066, %v1149
        %v1223 = vmul.f32 %v1071, %v1154
        %v1224 = vmul.f32 %v1074, %v1159
        %v1225 = vmul.f32 %v1079, %v1164
        %v1226 = vmul.f32 %v1082, %v1169
        %v1227 = vmul.f32 %v1087, %v1174
        %v1228 = vmul.f32 %v1090, %v1179
        %v1229 = vmul.f32 %v1095, %v1184
        %v1230 = vmul.f32 %v1098, %v1189
        %v1231 = vmul.f32 %v1103, %v1194
        %v1232 = vmul.f32 %v1106, %v1199
        %v1233 = vmul.f32 %v1111, %v1204
        %v1234 = vmul.f32 %v1114, %v1209
        %v1235 = vmul.f32 %v1119, %v1214
        %v1236 = vmul.f32 %v1122, %v1219
        %v1237 = vmul.f32 %v1221, 0.5
        %v1238 = vmul.f32 %v1222, 0.5
        %v1239 = vmul.f32 %v1223, 0.5
        %v1240 = vmul.f32 %v1224, 0.5
        %v1241 = vmul.f32 %v1225, 0.5
        %v1242 = vmul.f32 %v1226, 0.5
        %v1243 = vmul.f32 %v1227, 0.5
        %v1244 = vmul.f32 %v1228, 0.5
        %v1245 = vmul.f32 %v1229, 0.5
        %v1246 = vmul.f32 %v1230, 0.5
        %v1247 = vmul.f32 %v1231, 0.5
        %v1248 = vmul.f32 %v1232, 0.5
        %v1249 = vmul.f32 %v1233, 0.5
        %v1250 = vmul.f32 %v1234, 0.5
        %v1251 = vmul.f32 %v1235, 0.5
        %v1252 = vmul.f32 %v1236, 0.5
        %v1253 = vadd.f32 %v1237, 1.0
        %v1254 = vadd.f32 %v1238, 1.0
        %v1255 = vadd.f32 %v1239, 1.0
        %v1256 = vadd.f32 %v1240, 1.0
        %v1257 = vadd.f32 %v1241, 1.0
        %v1258 = vadd.f32 %v1242, 1.0
        %v1259 = vadd.f32 %v1243, 1.0
        %v1260 = vadd.f32 %v1244, 1.0
        %v1261 = vadd.f32 %v1245, 1.0
        %v1262 = vadd.f32 %v1246, 1.0
        %v1263 = vadd.f32 %v1247, 1.0
        %v1264 = vadd.f32 %v1248, 1.0
        %v1265 = vadd.f32 %v1249, 1.0
        %v1266 = vadd.f32 %v1250, 1.0
        %v1267 = vadd.f32 %v1251, 1.0
        %v1268 = vadd.f32 %v1252, 1.0
        %v1269 = vmul.f32 %v1221, %v1253
        %v1270 = vmul.f32 %v1222, %v1254
        %v1271 = vmul.f32 %v1223, %v1255
        %v1272 = vmul.f32 %v1224, %v1256
        %v1273 = vmul.f32 %v1225, %v1257
        %v1274 = vmul.f32 %v1226, %v1258
        %v1275 = vmul.f32 %v1227, %v1259
        %v1276 = vmul.f32 %v1228, %v1260
        %v1277 = vmul.f32 %v1229, %v1261
        %v1278 = vmul.f32 %v1230, %v1262
        %v1279 = vmul.f32 %v1231, %v1263
        %v1280 = vmul.f32 %v1232, %v1264
        %v1281 = vmul.f32 %v1233, %v1265
        %v1282 = vmul.f32 %v1234, %v1266
        %v1283 = vmul.f32 %v1235, %v1267
        %v1284 = vmul.f32 %v1236, %v1268
        %vm1285 = vcmp.gt.f32.partialorder %v1221, -0.001
        %vm1286 = vcmp.gt.f32.partialorder %v1222, -0.001
        %vm1287 = vcmp.gt.f32.partialorder %v1223, -0.001
        %vm1288 = vcmp.gt.f32.partialorder %v1224, -0.001
        %vm1289 = vcmp.gt.f32.partialorder %v1225, -0.001
        %vm1290 = vcmp.gt.f32.partialorder %v1226, -0.001
        %vm1291 = vcmp.gt.f32.partialorder %v1227, -0.001
        %vm1292 = vcmp.gt.f32.partialorder %v1228, -0.001
        %vm1293 = vcmp.gt.f32.partialorder %v1229, -0.001
        %vm1294 = vcmp.gt.f32.partialorder %v1230, -0.001
        %vm1295 = vcmp.gt.f32.partialorder %v1231, -0.001
        %vm1296 = vcmp.gt.f32.partialorder %v1232, -0.001
        %vm1297 = vcmp.gt.f32.partialorder %v1233, -0.001
        %vm1298 = vcmp.gt.f32.partialorder %v1234, -0.001
        %vm1299 = vcmp.gt.f32.partialorder %v1235, -0.001
        %vm1300 = vcmp.gt.f32.partialorder %v1236, -0.001
        %v1301 = vmul.f32 %v1221, 1.442695
        %v1302 = vpow.pop %v1301
        %v1303 = vmul.f32 %v1222, 1.442695
        %v1304 = vpow.pop %v1303
        %v1305 = vmul.f32 %v1223, 1.442695
        %v1306 = vpow.pop %v1305
        %v1307 = vmul.f32 %v1224, 1.442695
        %v1308 = vpow.pop %v1307
        %v1309 = vmul.f32 %v1225, 1.442695
        %v1310 = vpow.pop %v1309
        %v1311 = vmul.f32 %v1226, 1.442695
        %v1312 = vpow.pop %v1311
        %v1313 = vmul.f32 %v1227, 1.442695
        %v1314 = vpow.pop %v1313
        %v1315 = vmul.f32 %v1228, 1.442695
        %v1316 = vpow.pop %v1315
        %v1317 = vmul.f32 %v1229, 1.442695
        %v1318 = vpow.pop %v1317
        %v1319 = vmul.f32 %v1230, 1.442695
        %v1320 = vpow.pop %v1319
        %v1321 = vmul.f32 %v1231, 1.442695
        %v1322 = vpow.pop %v1321
        %v1323 = vmul.f32 %v1232, 1.442695
        %v1324 = vpow.pop %v1323
        %v1325 = vmul.f32 %v1233, 1.442695
        %v1326 = vpow.pop %v1325
        %v1327 = vmul.f32 %v1234, 1.442695
        %v1328 = vpow.pop %v1327
        %v1329 = vmul.f32 %v1235, 1.442695
        %v1330 = vpow.pop %v1329
        %v1331 = vmul.f32 %v1236, 1.442695
        %v1332 = vpow.pop %v1331
        %v1333 = vsub.f32 %v1302, 1.0
        %v1334 = vsub.f32 %v1304, 1.0
        %v1335 = vsub.f32 %v1306, 1.0
        %v1336 = vsub.f32 %v1308, 1.0
        %v1337 = vsub.f32 %v1310, 1.0
        %v1338 = vsub.f32 %v1312, 1.0
        %v1339 = vsub.f32 %v1314, 1.0
        %v1340 = vsub.f32 %v1316, 1.0
        %v1341 = vsub.f32 %v1318, 1.0
        %v1342 = vsub.f32 %v1320, 1.0
        %v1343 = vsub.f32 %v1322, 1.0
        %v1344 = vsub.f32 %v1324, 1.0
        %v1345 = vsub.f32 %v1326, 1.0
        %v1346 = vsub.f32 %v1328, 1.0
        %v1347 = vsub.f32 %v1330, 1.0
        %v1348 = vsub.f32 %v1332, 1.0
        %v1349 = vsel %vm1285, %v1269, %v1333
        %v1350 = vsel %vm1286, %v1270, %v1334
        %v1351 = vsel %vm1287, %v1271, %v1335
        %v1352 = vsel %vm1288, %v1272, %v1336
        %v1353 = vsel %vm1289, %v1273, %v1337
        %v1354 = vsel %vm1290, %v1274, %v1338
        %v1355 = vsel %vm1291, %v1275, %v1339
        %v1356 = vsel %vm1292, %v1276, %v1340
        %v1357 = vsel %vm1293, %v1277, %v1341
        %v1358 = vsel %vm1294, %v1278, %v1342
        %v1359 = vsel %vm1295, %v1279, %v1343
        %v1360 = vsel %vm1296, %v1280, %v1344
        %v1361 = vsel %vm1297, %v1281, %v1345
        %v1362 = vsel %vm1298, %v1282, %v1346
        %v1363 = vsel %vm1299, %v1283, %v1347
        %v1364 = vsel %vm1300, %v1284, %v1348
        %vm1365 = vcmp.gt.f32.partialorder %v1221, 0.0
        %vm1366 = vcmp.gt.f32.partialorder %v1222, 0.0
        %vm1367 = vcmp.gt.f32.partialorder %v1223, 0.0
        %vm1368 = vcmp.gt.f32.partialorder %v1224, 0.0
        %vm1369 = vcmp.gt.f32.partialorder %v1225, 0.0
        %vm1370 = vcmp.gt.f32.partialorder %v1226, 0.0
        %vm1371 = vcmp.gt.f32.partialorder %v1227, 0.0
        %vm1372 = vcmp.gt.f32.partialorder %v1228, 0.0
        %vm1373 = vcmp.gt.f32.partialorder %v1229, 0.0
        %vm1374 = vcmp.gt.f32.partialorder %v1230, 0.0
        %vm1375 = vcmp.gt.f32.partialorder %v1231, 0.0
        %vm1376 = vcmp.gt.f32.partialorder %v1232, 0.0
        %vm1377 = vcmp.gt.f32.partialorder %v1233, 0.0
        %vm1378 = vcmp.gt.f32.partialorder %v1234, 0.0
        %vm1379 = vcmp.gt.f32.partialorder %v1235, 0.0
        %vm1380 = vcmp.gt.f32.partialorder %v1236, 0.0
        %v1381 = vsel %vm1365, %v1221, %v1349
        %v1382 = vsel %vm1366, %v1222, %v1350
        %v1383 = vsel %vm1367, %v1223, %v1351
        %v1384 = vsel %vm1368, %v1224, %v1352
        %v1385 = vsel %vm1369, %v1225, %v1353
        %v1386 = vsel %vm1370, %v1226, %v1354
        %v1387 = vsel %vm1371, %v1227, %v1355
        %v1388 = vsel %vm1372, %v1228, %v1356
        %v1389 = vsel %vm1373, %v1229, %v1357
        %v1390 = vsel %vm1374, %v1230, %v1358
        %v1391 = vsel %vm1375, %v1231, %v1359
        %v1392 = vsel %vm1376, %v1232, %v1360
        %v1393 = vsel %vm1377, %v1233, %v1361
        %v1394 = vsel %vm1378, %v1234, %v1362
        %v1395 = vsel %vm1379, %v1235, %v1363
        %v1396 = vsel %vm1380, %v1236, %v1364
        %1397 = vst [vmem:[%s283] sm:$0xff] %v1381
        %1398 = vst [vmem:[%s283 + $0x8] sm:$0xff] %v1382
        %1399 = vst [vmem:[%s283 + $0x10] sm:$0xff] %v1383
        %1400 = vst [vmem:[%s283 + $0x18] sm:$0xff] %v1384
        %1401 = vst [vmem:[%s283 + $0x20] sm:$0xff] %v1385
        %1402 = vst [vmem:[%s283 + $0x28] sm:$0xff] %v1386
        %1403 = vst [vmem:[%s283 + $0x30] sm:$0xff] %v1387
        %1404 = vst [vmem:[%s283 + $0x38] sm:$0xff] %v1388
        %1405 = vst [vmem:[%s283 + $0x40] sm:$0xff] %v1389
        %1406 = vst [vmem:[%s283 + $0x48] sm:$0xff] %v1390
        %1407 = vst [vmem:[%s283 + $0x50] sm:$0xff] %v1391
        %1408 = vst [vmem:[%s283 + $0x58] sm:$0xff] %v1392
        %1409 = vst [vmem:[%s283 + $0x60] sm:$0xff] %v1393
        %1410 = vst [vmem:[%s283 + $0x68] sm:$0xff] %v1394
        %1411 = vst [vmem:[%s283 + $0x70] sm:$0xff] %v1395
        %1412 = vst [vmem:[%s283 + $0x78] sm:$0xff] %v1396
        %s1413 = sand.u32 %s127, 1
        %s1414 = scalar_lea.sflag [#allocation4], %s1413
        %s1415 = sand.u32 %s127, 1
        %s1416 = smul.addr %s1415, 128
        %s1417 = scalar_lea.vmem [#allocation10], %s1416
        // Predicated region
        $region53: #{tpu_custom_call.1} parent=35 // pred_check
          %p1418 = pneg %p137
        $region54: #{tpu_custom_call.1} parent=35 // pred_check_branch
          %1420 = sbr.rel (%p1418) target = $region56
        $region55: #{tpu_custom_call.1} parent=35 // pred_region
          %s1421 = smul.u32 16, %s25
          %s1423 = ssub.s32 2048, 2048
          %1424 = vsyncadd %s1414, %s1423
          %s1425 = smul.addr %s1421, 128
          %s1426 = scalar_lea.hbm %s4, %s1425
          %s1427 = sshll.u32 %s1417, 4
          %s1428 = int_to_ptr.vmem [resolvable:$true] %s1427
          %1433 = dma.vmem_to_hbm [thread:$0]  %s1428, 2048, %s1426, %s1414, 128, 128, 8
        $region56: #{tpu_custom_call.1} parent=35 // pred_fallthru
          _
      $region36: #{tpu_custom_call.1} parent=5 // pred_fallthru
        _
      %p1434 = scmp.le.s32.totalorder 2, %s20
      // Predicated region
      $region57: #{tpu_custom_call.1} parent=5 // pred_check
        %p1435 = pneg %p1434
      $region58: #{tpu_custom_call.1} parent=5 // pred_check_branch
        %1437 = sbr.rel (%p1435) target = $region60
      $region59: #{tpu_custom_call.1} parent=5 // pred_region
        %s1438 = ssub.s32 %s20, 2
        // Predicated region
        $region61: #{tpu_custom_call.1} parent=59 // pred_check
          %p1439 = pneg %p143
        $region62: #{tpu_custom_call.1} parent=59 // pred_check_branch
          %1441 = sbr.rel (%p1439) target = $region64
        $region63: #{tpu_custom_call.1} parent=59 // pred_region
          %s1442 = sand.u32 %s128, 1
          %s1443 = scalar_lea.sflag [#allocation4], %s1442
          %s1444 = sand.u32 %s128, 1
          %s1445 = smul.addr %s1444, 128
          %s1446 = scalar_lea.vmem [#allocation10], %s1445
          %1447 = dma.done %s1443, 2048
        $region64: #{tpu_custom_call.1} parent=59 // pred_fallthru
          _
      $region60: #{tpu_custom_call.1} parent=5 // pred_fallthru
        _
    $region6: #{tpu_custom_call.1} parent=1 // loop_footer
      %s24 = sadd.s32 1, %s20
    $region7: #{tpu_custom_call.1} parent=1 // loop_footer_branch
      %19 = sbr.rel target = $region3
    $region8: #{tpu_custom_call.1} parent=1 // loop_exit
      _
    %1448 = vsyncpa [#allocation3], 1
    %s1449 = scalar_lea.sflag [#allocation3], 1
    %1450 = vsyncpa %s1449, 1
    %1451 = vsyncpa [#allocation6], 1
    %1452 = vsyncpa [#allocation9], 1
    %s1453 = scalar_lea.sflag [#allocation9], 1
    %1454 = vsyncpa %s1453, 1
    %1455 = vsyncpa [#allocation4], 1
    %s1456 = scalar_lea.sflag [#allocation4], 1
    %1457 = vsyncpa %s1456, 1

</llo_original>
